<compile_context>
chip_gen: v6e
topology: v6e:2x2x1
jax: 0.10.0
libtpu: 0.0.40
codegen_flags: <defaults>
</compile_context>

<pallas_src>
import functools

import jax
import jax.numpy as jnp
from jax.experimental import pallas as pl
from jax.experimental.pallas import tpu as pltpu


def _round_up(x, m):
    return (x + m - 1) // m * m


# ----------------------------------------------------------------------------
# Pallas kernel: generator + discriminator on stacked [real; fake] input.
# All parameters live in one packed (rows, lanes) f32 VMEM buffer; `offsets`
# are static Python ints (sublane row offsets, 8-aligned) baked at trace time.
# ----------------------------------------------------------------------------
def mad_gan_kernel(x_ref, p_ref, z_ref, scores_ref, *, offsets, n, h):
    (og1w, og1b, og2w, og2b, og3w, og3b,
     od1w, od1b, od2w, od2b, od3w, od3b) = offsets

    def p(off, rows, cols):
        # Static slice of the packed parameter buffer (VMEM-resident).
        return p_ref[off:off + rows, :cols]

    def linear(v, w_off, w_rows, b_off, cols):
        return (
            jnp.dot(v, p(w_off, w_rows, cols), preferred_element_type=jnp.float32)
            + p(b_off, 1, cols)
        )

    x = x_ref[...]                                   # (1, n) float32

    # ---------------- generator: n -> h -> h -> n, sigmoid --------------------
    # (LeakyReLU with slope 1.0 == identity, so no activation between layers.)
    g1 = linear(x, og1w, n, og1b, h)                  # (1, h)
    g2 = linear(g1, og2w, h, og2b, h)                 # (1, h)
    z = jax.nn.sigmoid(linear(g2, og3w, h, og3b, n))  # (1, n)
    z_ref[...] = z

    # ---------------- discriminator on stacked [real; fake], M = 2 ------------
    xz = jnp.concatenate([x, z], axis=0)              # (2, n)
    d = linear(xz, od1w, n, od1b, h)                  # (2, h)
    d = linear(d, od2w, h, od2b, h)                   # (2, h)

    # Final h -> 1 layer as VPU multiply + lane reduction (weight stored as a
    # transposed (1, h) row); avoids an MXU push with one useful output lane.
    wd3_row = p(od3w, 1, h)                           # (1, h)
    bd3 = p(od3b, 1, 1)                               # (1, 1)
    s = jnp.sum(d * wd3_row, axis=-1, keepdims=True) + bd3   # (2, 1)
    scores_ref[...] = jax.nn.sigmoid(s)               # row 0 = real, row 1 = fake


# ----------------------------------------------------------------------------
# Parameter packing: one lane-padded f32 buffer, each entry 8-sublane aligned.
# Weights are stored as (in, out); the last discriminator weight is stored
# transposed as a (1, h) row so the kernel can use a VPU reduction.
# ----------------------------------------------------------------------------
def pack_params(params):
    wg1, bg1, wg2, bg2, wg3, bg3, wd1, bd1, wd2, bd2, wd3, bd3 = params
    entries = [wg1, bg1, wg2, bg2, wg3, bg3,
               wd1, bd1, wd2, bd2, wd3.T, bd3]

    lanes = max(_round_up(int(e.shape[1]), 128) for e in entries)
    offsets = []
    rows = 0
    for e in entries:
        offsets.append(rows)
        rows = _round_up(rows + int(e.shape[0]), 8)
    total_rows = _round_up(rows, 8)

    buf = jnp.zeros((total_rows, lanes), jnp.float32)
    for off, e in zip(offsets, entries):
        r, c = int(e.shape[0]), int(e.shape[1])
        buf = buf.at[off:off + r, :c].set(e.astype(jnp.float32))
    return buf, tuple(offsets)


# ----------------------------------------------------------------------------
# Wrapper
# ----------------------------------------------------------------------------
def mad_gan_forward(g, params, n_hidden):
    """g: (n_window, n_feats) float32.  Returns (z (n,), real (1,), fake (1,))."""
    n = g.size
    x = g.reshape(1, n).astype(jnp.float32)          # same as g.view(1, -1)

    packed, offsets = pack_params(params)

    kernel = functools.partial(
        mad_gan_kernel, offsets=offsets, n=n, h=n_hidden)

    vmem_spec = pl.BlockSpec(memory_space=pltpu.MemorySpace.VMEM)
    out_shapes = (
        jax.ShapeDtypeStruct((1, n), jnp.float32),   # z
        jax.ShapeDtypeStruct((2, 1), jnp.float32),   # [real; fake] scores
    )

    z, scores = pl.pallas_call(
        kernel,
        out_shape=out_shapes,
        in_specs=[vmem_spec, vmem_spec],
        out_specs=(vmem_spec, vmem_spec),
    )(x, packed)

    return z.reshape(-1), scores[0].reshape(-1), scores[1].reshape(-1)


# ----------------------------------------------------------------------------
# Deterministic parameter initialization (PyTorch Linear default: U(-k, k),
# k = 1/sqrt(fan_in)).  Weights stored as (in, out); biases as (1, out).
# ----------------------------------------------------------------------------
def init_linear(key, fan_in, fan_out):
    kw, kb = jax.random.split(key)
    bound = 1.0 / jnp.sqrt(jnp.float32(fan_in))
    w = jax.random.uniform(kw, (fan_in, fan_out), jnp.float32, -bound, bound)
    b = jax.random.uniform(kb, (1, fan_out), jnp.float32, -bound, bound)
    return w, b


def init_mad_gan_params(key, n, n_hidden):
    keys = jax.random.split(key, 6)
    # generator: Linear(n, h), Linear(h, h), Linear(h, n)
    wg1, bg1 = init_linear(keys[0], n, n_hidden)
    wg2, bg2 = init_linear(keys[1], n_hidden, n_hidden)
    wg3, bg3 = init_linear(keys[2], n_hidden, n)
    # discriminator: Linear(n, h), Linear(h, h), Linear(h, 1)
    wd1, bd1 = init_linear(keys[3], n, n_hidden)
    wd2, bd2 = init_linear(keys[4], n_hidden, n_hidden)
    wd3, bd3 = init_linear(keys[5], n_hidden, 1)
    return (wg1, bg1, wg2, bg2, wg3, bg3, wd1, bd1, wd2, bd2, wd3, bd3)


if __name__ == "__main__":
    # Small shapes consistent with the module: feats=8, window=8, hidden=32.
    n_feats = 8
    n_window = 8
    n_hidden = 32
    n = n_feats * n_window

    key = jax.random.PRNGKey(0)
    k_in, k_par = jax.random.split(key)

    g = jax.random.normal(k_in, (n_window, n_feats), jnp.float32)
    params = init_mad_gan_params(k_par, n, n_hidden)

    z, real_score, fake_score = mad_gan_forward(g, params, n_hidden)
    jax.block_until_ready((z, real_score, fake_score))

    assert z.shape == (n,)
    assert real_score.shape == (1,)
    assert fake_score.shape == (1,)

    # Pure-JAX reference check (identity "LeakyReLU", as in the PyTorch spec).
    wg1, bg1, wg2, bg2, wg3, bg3, wd1, bd1, wd2, bd2, wd3, bd3 = params
    x_ref = g.reshape(1, -1)
    z_ref = jax.nn.sigmoid(((x_ref @ wg1 + bg1) @ wg2 + bg2) @ wg3 + bg3)
    real_ref = jax.nn.sigmoid(((x_ref @ wd1 + bd1) @ wd2 + bd2) @ wd3 + bd3)
    fake_ref = jax.nn.sigmoid(((z_ref @ wd1 + bd1) @ wd2 + bd2) @ wd3 + bd3)
    assert jnp.allclose(z, z_ref.reshape(-1), atol=1e-5)
    assert jnp.allclose(real_score, real_ref.reshape(-1), atol=1e-5)
    assert jnp.allclose(fake_score, fake_ref.reshape(-1), atol=1e-5)

    print("KERNEL_OK")
</pallas_src>

<mosaic_0001>
module attributes {stable_mosaic.version = 11 : i64} {
  func.func @mad_gan_kernel(%arg0: memref<1x64xf32, #tpu.memory_space<vmem>>, %arg1: memref<280x128xf32, #tpu.memory_space<vmem>>, %arg2: memref<1x64xf32, #tpu.memory_space<vmem>>, %arg3: memref<2x1xf32, #tpu.memory_space<vmem>>) attributes {dimension_semantics = [], scalar_prefetch = 0 : i64, scratch_operands = 0 : i64, tpu.core_type = #tpu.core_type<tc>} {
    %c0 = arith.constant 0 : index
    %c0_0 = arith.constant 0 : index
    %0 = vector.load %arg0[%c0, %c0_0] : memref<1x64xf32, #tpu.memory_space<vmem>>, vector<1x64xf32>
    %c0_1 = arith.constant 0 : index
    %c0_2 = arith.constant 0 : index
    %1 = vector.load %arg1[%c0_1, %c0_2] : memref<280x128xf32, #tpu.memory_space<vmem>>, vector<64x32xf32>
    %cst = arith.constant dense<0.000000e+00> : vector<1x32xf32>
    %2 = tpu.matmul %0, %1, %cst {dimension_numbers = #tpu.dot_dimension_numbers<[1], [0], [0], [1], [0, 0, 1, 1], [], []>} : vector<1x64xf32>, vector<64x32xf32>, vector<1x32xf32> -> vector<1x32xf32>
    %c64 = arith.constant 64 : index
    %c0_3 = arith.constant 0 : index
    %3 = vector.load %arg1[%c64, %c0_3] : memref<280x128xf32, #tpu.memory_space<vmem>>, vector<1x32xf32>
    %4 = arith.addf %2, %3 : vector<1x32xf32>
    %c72 = arith.constant 72 : index
    %c0_4 = arith.constant 0 : index
    %5 = vector.load %arg1[%c72, %c0_4] : memref<280x128xf32, #tpu.memory_space<vmem>>, vector<32x32xf32>
    %cst_5 = arith.constant dense<0.000000e+00> : vector<1x32xf32>
    %6 = tpu.matmul %4, %5, %cst_5 {dimension_numbers = #tpu.dot_dimension_numbers<[1], [0], [0], [1], [0, 0, 1, 1], [], []>} : vector<1x32xf32>, vector<32x32xf32>, vector<1x32xf32> -> vector<1x32xf32>
    %c104 = arith.constant 104 : index
    %c0_6 = arith.constant 0 : index
    %7 = vector.load %arg1[%c104, %c0_6] : memref<280x128xf32, #tpu.memory_space<vmem>>, vector<1x32xf32>
    %8 = arith.addf %6, %7 : vector<1x32xf32>
    %c112 = arith.constant 112 : index
    %c0_7 = arith.constant 0 : index
    %9 = vector.load %arg1[%c112, %c0_7] : memref<280x128xf32, #tpu.memory_space<vmem>>, vector<32x64xf32>
    %cst_8 = arith.constant dense<0.000000e+00> : vector<1x64xf32>
    %10 = tpu.matmul %8, %9, %cst_8 {dimension_numbers = #tpu.dot_dimension_numbers<[1], [0], [0], [1], [0, 0, 1, 1], [], []>} : vector<1x32xf32>, vector<32x64xf32>, vector<1x64xf32> -> vector<1x64xf32>
    %c144 = arith.constant 144 : index
    %c0_9 = arith.constant 0 : index
    %11 = vector.load %arg1[%c144, %c0_9] : memref<280x128xf32, #tpu.memory_space<vmem>>, vector<1x64xf32>
    %12 = arith.addf %10, %11 : vector<1x64xf32>
    %13 = arith.negf %12 : vector<1x64xf32>
    %14 = math.exp %13 : vector<1x64xf32>
    %cst_10 = arith.constant 1.000000e+00 : f32
    %15 = vector.broadcast %cst_10 : f32 to vector<1x64xf32>
    %16 = arith.addf %15, %14 : vector<1x64xf32>
    %17 = arith.divf %15, %16 : vector<1x64xf32>
    %c0_11 = arith.constant 0 : index
    %c0_12 = arith.constant 0 : index
    %18 = vector.load %arg2[%c0_11, %c0_12] : memref<1x64xf32, #tpu.memory_space<vmem>>, vector<1x64xf32>
    tpu.vector_store %arg2[%c0_11, %c0_12], %17 {strides = array<i32>} : memref<1x64xf32, #tpu.memory_space<vmem>>, vector<1x64xf32>,
    %19 = tpu.concatenate %0, %17 in 0 : vector<1x64xf32>, vector<1x64xf32> -> vector<2x64xf32>
    %c152 = arith.constant 152 : index
    %c0_13 = arith.constant 0 : index
    %20 = vector.load %arg1[%c152, %c0_13] : memref<280x128xf32, #tpu.memory_space<vmem>>, vector<64x32xf32>
    %cst_14 = arith.constant dense<0.000000e+00> : vector<2x32xf32>
    %21 = tpu.matmul %19, %20, %cst_14 {dimension_numbers = #tpu.dot_dimension_numbers<[1], [0], [0], [1], [0, 0, 1, 1], [], []>} : vector<2x64xf32>, vector<64x32xf32>, vector<2x32xf32> -> vector<2x32xf32>
    %c216 = arith.constant 216 : index
    %c0_15 = arith.constant 0 : index
    %22 = vector.load %arg1[%c216, %c0_15] : memref<280x128xf32, #tpu.memory_space<vmem>>, vector<1x32xf32>
    %23 = vector.broadcast %22 : vector<1x32xf32> to vector<2x32xf32>
    %24 = arith.addf %21, %23 : vector<2x32xf32>
    %c224 = arith.constant 224 : index
    %c0_16 = arith.constant 0 : index
    %25 = vector.load %arg1[%c224, %c0_16] : memref<280x128xf32, #tpu.memory_space<vmem>>, vector<32x32xf32>
    %cst_17 = arith.constant dense<0.000000e+00> : vector<2x32xf32>
    %26 = tpu.matmul %24, %25, %cst_17 {dimension_numbers = #tpu.dot_dimension_numbers<[1], [0], [0], [1], [0, 0, 1, 1], [], []>} : vector<2x32xf32>, vector<32x32xf32>, vector<2x32xf32> -> vector<2x32xf32>
    %c256 = arith.constant 256 : index
    %c0_18 = arith.constant 0 : index
    %27 = vector.load %arg1[%c256, %c0_18] : memref<280x128xf32, #tpu.memory_space<vmem>>, vector<1x32xf32>
    %28 = vector.broadcast %27 : vector<1x32xf32> to vector<2x32xf32>
    %29 = arith.addf %26, %28 : vector<2x32xf32>
    %c264 = arith.constant 264 : index
    %c0_19 = arith.constant 0 : index
    %30 = vector.load %arg1[%c264, %c0_19] : memref<280x128xf32, #tpu.memory_space<vmem>>, vector<1x32xf32>
    %c272 = arith.constant 272 : index
    %c0_20 = arith.constant 0 : index
    %31 = vector.load %arg1[%c272, %c0_20] : memref<280x128xf32, #tpu.memory_space<vmem>>, vector<1x1xf32>
    %32 = vector.broadcast %30 : vector<1x32xf32> to vector<2x32xf32>
    %33 = arith.mulf %29, %32 : vector<2x32xf32>
    %cst_21 = arith.constant dense<0.000000e+00> : vector<2xf32>
    %34 = vector.multi_reduction <add>, %33, %cst_21 [1] : vector<2x32xf32> to vector<2xf32>
    %35 = vector.shape_cast %34 : vector<2xf32> to vector<2x1xf32>
    %36 = vector.broadcast %31 : vector<1x1xf32> to vector<2x1xf32>
    %37 = arith.addf %35, %36 : vector<2x1xf32>
    %38 = arith.negf %37 : vector<2x1xf32>
    %39 = math.exp %38 : vector<2x1xf32>
    %cst_22 = arith.constant 1.000000e+00 : f32
    %40 = vector.broadcast %cst_22 : f32 to vector<2x1xf32>
    %41 = arith.addf %40, %39 : vector<2x1xf32>
    %42 = arith.divf %40, %41 : vector<2x1xf32>
    %c0_23 = arith.constant 0 : index
    %c0_24 = arith.constant 0 : index
    %43 = vector.load %arg3[%c0_23, %c0_24] : memref<2x1xf32, #tpu.memory_space<vmem>>, vector<2x1xf32>
    tpu.vector_store %arg3[%c0_23, %c0_24], %42 {strides = array<i32>} : memref<2x1xf32, #tpu.memory_space<vmem>>, vector<2x1xf32>,
    return
  }
}

</mosaic_0001>

<llo_original>
// kernel: tpu_custom_call.1
$region0: #{tpu_custom_call.1}
  #allocation0 [shape = 'u32[]', space=smem, size = 0x4, offset = 0x4, fixed_abs, tag = 'smem constant byte address 0x4 - core index']
  #allocation1 [shape = 'u32[144,128]{1,0:T(1,128)}', space=vmem, size = 0x12000, scoped, tag = 'internal scratch']
  %s0 = inlined_call_operand.hbm [shape: f32[1,64], index: 0, kind: input, shape index: {}]
  %s1 = inlined_call_operand.hbm [shape: f32[280,128], index: 1, kind: input, shape index: {}]
  %s2 = inlined_call_operand.hbm [shape: f32[1,64], index: 2, kind: output, shape index: {0}]
  %s3 = inlined_call_operand.vmem [shape: f32[2,1], index: 3, kind: output, shape index: {1}]
  %4 = xla_tuple %s2, %s3
  %s5 = sld [smem:[#allocation0]]
  $region34: #{tpu_custom_call.1} parent=0
    _
  %s7 = ssub.s32 1, %s5
  %s8 = scalar_select 0, %s7, %s5
  $region1: #{tpu_custom_call.1} parent=0
    #allocation2 [shape = 'u8[512]{0}', space=vmem, size = 0x400, scoped, tag = 'input window, operand 0, single buffered']
    #allocation3 [shape = 's32[1]{0}', space=sflag, size = 0x4, scoped, tag = 'scoped memory for tpu_custom_call.1']
    #allocation4 [shape = 's32[1]{0}', space=sflag, size = 0x4, scoped, tag = 'scoped memory for tpu_custom_call.1']
    #allocation5 [shape = 'u8[143360]{0}', space=vmem, size = 0x23000, scoped, tag = 'input window, operand 1, single buffered']
    #allocation6 [shape = 's32[1]{0}', space=sflag, size = 0x4, scoped, tag = 'scoped memory for tpu_custom_call.1']
    #allocation7 [shape = 'u8[512]{0}', space=vmem, size = 0x400, scoped, tag = 'output window, operand 0, single buffered']
    %9 = vsyncpa [#allocation3], 0
    %10 = vsyncpa [#allocation6], 0
    %11 = vsyncpa [#allocation4], 0
    // Predicated region
    $region2: #{tpu_custom_call.1} parent=1 // pred_check
      _
    $region3: #{tpu_custom_call.1} parent=1 // pred_check_branch
      %13 = sbr.rel (0) target = $region5
    $region4: #{tpu_custom_call.1} parent=1 // pred_region
      %s15 = ssub.s32 16, 16
      %16 = vsyncadd [#allocation3], %s15
      %s18 = sshll.u32 [#allocation2], 4
      %s19 = int_to_ptr.vmem [resolvable:$true] %s18
      %21 = dma.hbm_to_vmem [thread:$0]  %s0, 16, %s19, [#allocation3]
    $region5: #{tpu_custom_call.1} parent=1 // pred_fallthru
      _
    // Predicated region
    $region6: #{tpu_custom_call.1} parent=1 // pred_check
      _
    $region7: #{tpu_custom_call.1} parent=1 // pred_check_branch
      %23 = sbr.rel (0) target = $region9
    $region8: #{tpu_custom_call.1} parent=1 // pred_region
      %s25 = ssub.s32 4480, 4480
      %26 = vsyncadd [#allocation6], %s25
      %s27 = sshll.u32 [#allocation5], 4
      %s28 = int_to_ptr.vmem [resolvable:$true] %s27
      %33 = dma.hbm_to_vmem [thread:$0]  %s1, 4480, %s28, [#allocation6], 128, 128, 8
    $region9: #{tpu_custom_call.1} parent=1 // pred_fallthru
      _
    // Predicated region
    $region10: #{tpu_custom_call.1} parent=1 // pred_check
      _
    $region11: #{tpu_custom_call.1} parent=1 // pred_check_branch
      %35 = sbr.rel (0) target = $region13
    $region12: #{tpu_custom_call.1} parent=1 // pred_region
      %36 = dma.done [#allocation3], 16
    $region13: #{tpu_custom_call.1} parent=1 // pred_fallthru
      _
    // Predicated region
    $region14: #{tpu_custom_call.1} parent=1 // pred_check
      _
    $region15: #{tpu_custom_call.1} parent=1 // pred_check_branch
      %38 = sbr.rel (0) target = $region17
    $region16: #{tpu_custom_call.1} parent=1 // pred_region
      %39 = dma.done [#allocation6], 4480
    $region17: #{tpu_custom_call.1} parent=1 // pred_fallthru
      _
    %v40 = vld [vmem:[#allocation2] sm:$0x1]
    %v41 = vld [vmem:[#allocation5] sm:$0xff]
    %v42 = vld [vmem:[#allocation5 + $0x8] sm:$0xff]
    %v43 = vld [vmem:[#allocation5 + $0x10] sm:$0xff]
    %v44 = vld [vmem:[#allocation5 + $0x18] sm:$0xff]
    %v45 = vld [vmem:[#allocation5 + $0x20] sm:$0xff]
    %v46 = vld [vmem:[#allocation5 + $0x28] sm:$0xff]
    %v47 = vld [vmem:[#allocation5 + $0x30] sm:$0xff]
    %v48 = vld [vmem:[#allocation5 + $0x38] sm:$0xff]
    %v49 = vld [vmem:[#allocation5 + $0x40] sm:$0x1]
    %vm50 = vcmask 523264
    %v52 = vsel %vm50, %v40, 0
    %54 = vmatprep.subr.mxu0 0.0
    %55 = vmatpush1.msra.mxu0 0.0
    %56 = vmatprep.subr.mxu0 0.0
    %57 = vmatpush1.msra.mxu0 0.0
    %58 = vmatprep.subr.mxu0 0.0
    %59 = vmatpush1.msra.mxu0 0.0
    %60 = vmatprep.subr.mxu0 0.0
    %61 = vmatpush1.msra.mxu0 0.0
    %62 = vmatprep.subr.mxu0 0.0
    %63 = vmatpush1.msra.mxu0 0.0
    %64 = vmatprep.subr.mxu0 0.0
    %65 = vmatpush1.msra.mxu0 0.0
    %66 = vmatprep.subr.mxu0 0.0
    %67 = vmatpush1.msra.mxu0 0.0
    %68 = vmatprep.subr.mxu0 0.0
    %69 = vmatpush1.msra.mxu0 0.0
    %70 = vmatprep.subr.mxu0 0.0
    %71 = vmatpush1.msra.mxu0 %v48
    %72 = vmatprep.subr.mxu0 0.0
    %73 = vmatpush1.msra.mxu0 %v47
    %74 = vmatprep.subr.mxu0 0.0
    %75 = vmatpush1.msra.mxu0 %v46
    %76 = vmatprep.subr.mxu0 0.0
    %77 = vmatpush1.msra.mxu0 %v45
    %78 = vmatprep.subr.mxu0 0.0
    %79 = vmatpush1.msra.mxu0 %v44
    %80 = vmatprep.subr.mxu0 0.0
    %81 = vmatpush1.msra.mxu0 %v43
    %82 = vmatprep.subr.mxu0 0.0
    %83 = vmatpush1.msra.mxu0 %v42
    %84 = vmatprep.subr.mxu0 0.0
    %85 = vmatpush1.msra.mxu0 %v41
    %86 = vmatprep.subr.mxu0 0.0
    %87 = vmatpush2.msra.mxu0 0.0
    %88 = vmatprep.subr.mxu0 0.0
    %89 = vmatpush2.msra.mxu0 0.0
    %90 = vmatprep.subr.mxu0 0.0
    %91 = vmatpush2.msra.mxu0 0.0
    %92 = vmatprep.subr.mxu0 0.0
    %93 = vmatpush2.msra.mxu0 0.0
    %94 = vmatprep.subr.mxu0 0.0
    %95 = vmatpush2.msra.mxu0 0.0
    %96 = vmatprep.subr.mxu0 0.0
    %97 = vmatpush2.msra.mxu0 0.0
    %98 = vmatprep.subr.mxu0 0.0
    %99 = vmatpush2.msra.mxu0 0.0
    %100 = vmatprep.subr.mxu0 0.0
    %101 = vmatpush2.msra.mxu0 0.0
    %102 = vmatprep.subr.mxu0 0.0
    %103 = vmatpush2.msra.mxu0 0.0
    %104 = vmatprep.subr.mxu0 0.0
    %105 = vmatpush2.msra.mxu0 0.0
    %106 = vmatprep.subr.mxu0 0.0
    %107 = vmatpush2.msra.mxu0 0.0
    %108 = vmatprep.subr.mxu0 0.0
    %109 = vmatpush2.msra.mxu0 0.0
    %110 = vmatprep.subr.mxu0 0.0
    %111 = vmatpush2.msra.mxu0 0.0
    %112 = vmatprep.subr.mxu0 0.0
    %113 = vmatpush2.msra.mxu0 0.0
    %114 = vmatprep.subr.mxu0 0.0
    %115 = vmatpush2.msra.mxu0 0.0
    %116 = vmatprep.subr.mxu0 0.0
    %117 = vmatpush2.msra.mxu0 0.0
    %118 = vmatprep.mubr.f32.mxu0 0.0
    %119 = vmatmul.mubr.f32.gmra.mxu0 %v52
    %v120 = vpop.f32.mrf.mxu0
    %v121 = vadd.f32 %v49, %v120
    %v122 = vpop.f32.mrf.mxu0
    %123 = vdwg.mxu0
    %v124 = vld [vmem:[#allocation5 + $0x48] sm:$0xff]
    %v125 = vld [vmem:[#allocation5 + $0x50] sm:$0xff]
    %v126 = vld [vmem:[#allocation5 + $0x58] sm:$0xff]
    %v127 = vld [vmem:[#allocation5 + $0x60] sm:$0xff]
    %v128 = vld [vmem:[#allocation5 + $0x68] sm:$0x1]
    %vm129 = vcmask 261120
    %v131 = vsel %vm129, %v121, 0
    %133 = vmatprep.subr.mxu0 0.0
    %134 = vmatpush1.msra.mxu0 0.0
    %135 = vmatprep.subr.mxu0 0.0
    %136 = vmatpush1.msra.mxu0 0.0
    %137 = vmatprep.subr.mxu0 0.0
    %138 = vmatpush1.msra.mxu0 0.0
    %139 = vmatprep.subr.mxu0 0.0
    %140 = vmatpush1.msra.mxu0 0.0
    %141 = vmatprep.subr.mxu0 0.0
    %142 = vmatpush1.msra.mxu0 0.0
    %143 = vmatprep.subr.mxu0 0.0
    %144 = vmatpush1.msra.mxu0 0.0
    %145 = vmatprep.subr.mxu0 0.0
    %146 = vmatpush1.msra.mxu0 0.0
    %147 = vmatprep.subr.mxu0 0.0
    %148 = vmatpush1.msra.mxu0 0.0
    %149 = vmatprep.subr.mxu0 0.0
    %150 = vmatpush1.msra.mxu0 0.0
    %151 = vmatprep.subr.mxu0 0.0
    %152 = vmatpush1.msra.mxu0 0.0
    %153 = vmatprep.subr.mxu0 0.0
    %154 = vmatpush1.msra.mxu0 0.0
    %155 = vmatprep.subr.mxu0 0.0
    %156 = vmatpush1.msra.mxu0 0.0
    %157 = vmatprep.subr.mxu0 0.0
    %158 = vmatpush1.msra.mxu0 %v127
    %159 = vmatprep.subr.mxu0 0.0
    %160 = vmatpush1.msra.mxu0 %v126
    %161 = vmatprep.subr.mxu0 0.0
    %162 = vmatpush1.msra.mxu0 %v125
    %163 = vmatprep.subr.mxu0 0.0
    %164 = vmatpush1.msra.mxu0 %v124
    %165 = vmatprep.subr.mxu0 0.0
    %166 = vmatpush2.msra.mxu0 0.0
    %167 = vmatprep.subr.mxu0 0.0
    %168 = vmatpush2.msra.mxu0 0.0
    %169 = vmatprep.subr.mxu0 0.0
    %170 = vmatpush2.msra.mxu0 0.0
    %171 = vmatprep.subr.mxu0 0.0
    %172 = vmatpush2.msra.mxu0 0.0
    %173 = vmatprep.subr.mxu0 0.0
    %174 = vmatpush2.msra.mxu0 0.0
    %175 = vmatprep.subr.mxu0 0.0
    %176 = vmatpush2.msra.mxu0 0.0
    %177 = vmatprep.subr.mxu0 0.0
    %178 = vmatpush2.msra.mxu0 0.0
    %179 = vmatprep.subr.mxu0 0.0
    %180 = vmatpush2.msra.mxu0 0.0
    %181 = vmatprep.subr.mxu0 0.0
    %182 = vmatpush2.msra.mxu0 0.0
    %183 = vmatprep.subr.mxu0 0.0
    %184 = vmatpush2.msra.mxu0 0.0
    %185 = vmatprep.subr.mxu0 0.0
    %186 = vmatpush2.msra.mxu0 0.0
    %187 = vmatprep.subr.mxu0 0.0
    %188 = vmatpush2.msra.mxu0 0.0
    %189 = vmatprep.subr.mxu0 0.0
    %190 = vmatpush2.msra.mxu0 0.0
    %191 = vmatprep.subr.mxu0 0.0
    %192 = vmatpush2.msra.mxu0 0.0
    %193 = vmatprep.subr.mxu0 0.0
    %194 = vmatpush2.msra.mxu0 0.0
    %195 = vmatprep.subr.mxu0 0.0
    %196 = vmatpush2.msra.mxu0 0.0
    %197 = vmatprep.mubr.f32.mxu0 0.0
    %198 = vmatmul.mubr.f32.gmra.mxu0 %v131
    %v199 = vpop.f32.mrf.mxu0
    %v200 = vadd.f32 %v128, %v199
    %v201 = vpop.f32.mrf.mxu0
    %202 = vdwg.mxu0
    %v203 = vld [vmem:[#allocation5 + $0x70] sm:$0xff]
    %v204 = vld [vmem:[#allocation5 + $0x78] sm:$0xff]
    %v205 = vld [vmem:[#allocation5 + $0x80] sm:$0xff]
    %v206 = vld [vmem:[#allocation5 + $0x88] sm:$0xff]
    %v207 = vld [vmem:[#allocation5 + $0x90] sm:$0x1]
    %v209 = vsel %vm129, %v200, 0
    %211 = vmatprep.subr.mxu0 0.0
    %212 = vmatpush1.msra.mxu0 0.0
    %213 = vmatprep.subr.mxu0 0.0
    %214 = vmatpush1.msra.mxu0 0.0
    %215 = vmatprep.subr.mxu0 0.0
    %216 = vmatpush1.msra.mxu0 0.0
    %217 = vmatprep.subr.mxu0 0.0
    %218 = vmatpush1.msra.mxu0 0.0
    %219 = vmatprep.subr.mxu0 0.0
    %220 = vmatpush1.msra.mxu0 0.0
    %221 = vmatprep.subr.mxu0 0.0
    %222 = vmatpush1.msra.mxu0 0.0
    %223 = vmatprep.subr.mxu0 0.0
    %224 = vmatpush1.msra.mxu0 0.0
    %225 = vmatprep.subr.mxu0 0.0
    %226 = vmatpush1.msra.mxu0 0.0
    %227 = vmatprep.subr.mxu0 0.0
    %228 = vmatpush1.msra.mxu0 0.0
    %229 = vmatprep.subr.mxu0 0.0
    %230 = vmatpush1.msra.mxu0 0.0
    %231 = vmatprep.subr.mxu0 0.0
    %232 = vmatpush1.msra.mxu0 0.0
    %233 = vmatprep.subr.mxu0 0.0
    %234 = vmatpush1.msra.mxu0 0.0
    %235 = vmatprep.subr.mxu0 0.0
    %236 = vmatpush1.msra.mxu0 %v206
    %237 = vmatprep.subr.mxu0 0.0
    %238 = vmatpush1.msra.mxu0 %v205
    %239 = vmatprep.subr.mxu0 0.0
    %240 = vmatpush1.msra.mxu0 %v204
    %241 = vmatprep.subr.mxu0 0.0
    %242 = vmatpush1.msra.mxu0 %v203
    %243 = vmatprep.subr.mxu0 0.0
    %244 = vmatpush2.msra.mxu0 0.0
    %245 = vmatprep.subr.mxu0 0.0
    %246 = vmatpush2.msra.mxu0 0.0
    %247 = vmatprep.subr.mxu0 0.0
    %248 = vmatpush2.msra.mxu0 0.0
    %249 = vmatprep.subr.mxu0 0.0
    %250 = vmatpush2.msra.mxu0 0.0
    %251 = vmatprep.subr.mxu0 0.0
    %252 = vmatpush2.msra.mxu0 0.0
    %253 = vmatprep.subr.mxu0 0.0
    %254 = vmatpush2.msra.mxu0 0.0
    %255 = vmatprep.subr.mxu0 0.0
    %256 = vmatpush2.msra.mxu0 0.0
    %257 = vmatprep.subr.mxu0 0.0
    %258 = vmatpush2.msra.mxu0 0.0
    %259 = vmatprep.subr.mxu0 0.0
    %260 = vmatpush2.msra.mxu0 0.0
    %261 = vmatprep.subr.mxu0 0.0
    %262 = vmatpush2.msra.mxu0 0.0
    %263 = vmatprep.subr.mxu0 0.0
    %264 = vmatpush2.msra.mxu0 0.0
    %265 = vmatprep.subr.mxu0 0.0
    %266 = vmatpush2.msra.mxu0 0.0
    %267 = vmatprep.subr.mxu0 0.0
    %268 = vmatpush2.msra.mxu0 0.0
    %269 = vmatprep.subr.mxu0 0.0
    %270 = vmatpush2.msra.mxu0 0.0
    %271 = vmatprep.subr.mxu0 0.0
    %272 = vmatpush2.msra.mxu0 0.0
    %273 = vmatprep.subr.mxu0 0.0
    %274 = vmatpush2.msra.mxu0 0.0
    %275 = vmatprep.mubr.f32.mxu0 0.0
    %276 = vmatmul.mubr.f32.gmra.mxu0 %v209
    %v277 = vpop.f32.mrf.mxu0
    %v278 = vadd.f32 %v207, %v277
    %v279 = vpop.f32.mrf.mxu0
    %280 = vdwg.mxu0
    %v281 = vxor.u32 %v278, 2147483648
    %v282 = vmul.f32 %v281, 1.442695
    %v283 = vpow.pop %v282
    %v284 = vadd.f32 %v283, 1.0
    %v285 = vrcp.pop %v284
    %v286 = vmul.f32 1.0, %v285
    %vm287 = vcmask 516096
    %288 = vst.msk [vmem:[#allocation7] sm:$0x1] %vm287, %v286
    %v290 = vrot.slane %v286, 7
    %vm292 = vcmask 1040384
    %v293 = vsel %vm292, %v40, %v290
    %v294 = vld [vmem:[#allocation5 + $0x98] sm:$0xff]
    %v295 = vld [vmem:[#allocation5 + $0xa0] sm:$0xff]
    %v296 = vld [vmem:[#allocation5 + $0xa8] sm:$0xff]
    %v297 = vld [vmem:[#allocation5 + $0xb0] sm:$0xff]
    %v298 = vld [vmem:[#allocation5 + $0xb8] sm:$0xff]
    %v299 = vld [vmem:[#allocation5 + $0xc0] sm:$0xff]
    %v300 = vld [vmem:[#allocation5 + $0xc8] sm:$0xff]
    %v301 = vld [vmem:[#allocation5 + $0xd0] sm:$0xff]
    %v302 = vld [vmem:[#allocation5 + $0xd8] sm:$0x1]
    %v303 = vlaneseq
    %v304 = vshrl.u32 %v303, 7
    %v305 = vsub.s32 0, %v304
    %v306 = vrot.slane %v302, %v305
    %v308 = vsel %vm50, %v293, 0
    %310 = vmatprep.subr.mxu0 0.0
    %311 = vmatpush1.msra.mxu0 0.0
    %312 = vmatprep.subr.mxu0 0.0
    %313 = vmatpush1.msra.mxu0 0.0
    %314 = vmatprep.subr.mxu0 0.0
    %315 = vmatpush1.msra.mxu0 0.0
    %316 = vmatprep.subr.mxu0 0.0
    %317 = vmatpush1.msra.mxu0 0.0
    %318 = vmatprep.subr.mxu0 0.0
    %319 = vmatpush1.msra.mxu0 0.0
    %320 = vmatprep.subr.mxu0 0.0
    %321 = vmatpush1.msra.mxu0 0.0
    %322 = vmatprep.subr.mxu0 0.0
    %323 = vmatpush1.msra.mxu0 0.0
    %324 = vmatprep.subr.mxu0 0.0
    %325 = vmatpush1.msra.mxu0 0.0
    %326 = vmatprep.subr.mxu0 0.0
    %327 = vmatpush1.msra.mxu0 %v301
    %328 = vmatprep.subr.mxu0 0.0
    %329 = vmatpush1.msra.mxu0 %v300
    %330 = vmatprep.subr.mxu0 0.0
    %331 = vmatpush1.msra.mxu0 %v299
    %332 = vmatprep.subr.mxu0 0.0
    %333 = vmatpush1.msra.mxu0 %v298
    %334 = vmatprep.subr.mxu0 0.0
    %335 = vmatpush1.msra.mxu0 %v297
    %336 = vmatprep.subr.mxu0 0.0
    %337 = vmatpush1.msra.mxu0 %v296
    %338 = vmatprep.subr.mxu0 0.0
    %339 = vmatpush1.msra.mxu0 %v295
    %340 = vmatprep.subr.mxu0 0.0
    %341 = vmatpush1.msra.mxu0 %v294
    %342 = vmatprep.subr.mxu0 0.0
    %343 = vmatpush2.msra.mxu0 0.0
    %344 = vmatprep.subr.mxu0 0.0
    %345 = vmatpush2.msra.mxu0 0.0
    %346 = vmatprep.subr.mxu0 0.0
    %347 = vmatpush2.msra.mxu0 0.0
    %348 = vmatprep.subr.mxu0 0.0
    %349 = vmatpush2.msra.mxu0 0.0
    %350 = vmatprep.subr.mxu0 0.0
    %351 = vmatpush2.msra.mxu0 0.0
    %352 = vmatprep.subr.mxu0 0.0
    %353 = vmatpush2.msra.mxu0 0.0
    %354 = vmatprep.subr.mxu0 0.0
    %355 = vmatpush2.msra.mxu0 0.0
    %356 = vmatprep.subr.mxu0 0.0
    %357 = vmatpush2.msra.mxu0 0.0
    %358 = vmatprep.subr.mxu0 0.0
    %359 = vmatpush2.msra.mxu0 0.0
    %360 = vmatprep.subr.mxu0 0.0
    %361 = vmatpush2.msra.mxu0 0.0
    %362 = vmatprep.subr.mxu0 0.0
    %363 = vmatpush2.msra.mxu0 0.0
    %364 = vmatprep.subr.mxu0 0.0
    %365 = vmatpush2.msra.mxu0 0.0
    %366 = vmatprep.subr.mxu0 0.0
    %367 = vmatpush2.msra.mxu0 0.0
    %368 = vmatprep.subr.mxu0 0.0
    %369 = vmatpush2.msra.mxu0 0.0
    %370 = vmatprep.subr.mxu0 0.0
    %371 = vmatpush2.msra.mxu0 0.0
    %372 = vmatprep.subr.mxu0 0.0
    %373 = vmatpush2.msra.mxu0 0.0
    %374 = vmatprep.mubr.f32.mxu0 0.0
    %375 = vmatmul.mubr.f32.gmra.mxu0 %v308
    %v376 = vpop.f32.mrf.mxu0
    %v377 = vadd.f32 %v306, %v376
    %v378 = vpop.f32.mrf.mxu0
    %379 = vdwg.mxu0
    %v380 = vld [vmem:[#allocation5 + $0xe0] sm:$0xff]
    %v381 = vld [vmem:[#allocation5 + $0xe8] sm:$0xff]
    %v382 = vld [vmem:[#allocation5 + $0xf0] sm:$0xff]
    %v383 = vld [vmem:[#allocation5 + $0xf8] sm:$0xff]
    %v384 = vld [vmem:[#allocation5 + $0x100] sm:$0x1]
    %v385 = vlaneseq
    %v386 = vshrl.u32 %v385, 7
    %v387 = vsub.s32 0, %v386
    %v388 = vrot.slane %v384, %v387
    %v390 = vsel %vm129, %v377, 0
    %392 = vmatprep.subr.mxu0 0.0
    %393 = vmatpush1.msra.mxu0 0.0
    %394 = vmatprep.subr.mxu0 0.0
    %395 = vmatpush1.msra.mxu0 0.0
    %396 = vmatprep.subr.mxu0 0.0
    %397 = vmatpush1.msra.mxu0 0.0
    %398 = vmatprep.subr.mxu0 0.0
    %399 = vmatpush1.msra.mxu0 0.0
    %400 = vmatprep.subr.mxu0 0.0
    %401 = vmatpush1.msra.mxu0 0.0
    %402 = vmatprep.subr.mxu0 0.0
    %403 = vmatpush1.msra.mxu0 0.0
    %404 = vmatprep.subr.mxu0 0.0
    %405 = vmatpush1.msra.mxu0 0.0
    %406 = vmatprep.subr.mxu0 0.0
    %407 = vmatpush1.msra.mxu0 0.0
    %408 = vmatprep.subr.mxu0 0.0
    %409 = vmatpush1.msra.mxu0 0.0
    %410 = vmatprep.subr.mxu0 0.0
    %411 = vmatpush1.msra.mxu0 0.0
    %412 = vmatprep.subr.mxu0 0.0
    %413 = vmatpush1.msra.mxu0 0.0
    %414 = vmatprep.subr.mxu0 0.0
    %415 = vmatpush1.msra.mxu0 0.0
    %416 = vmatprep.subr.mxu0 0.0
    %417 = vmatpush1.msra.mxu0 %v383
    %418 = vmatprep.subr.mxu0 0.0
    %419 = vmatpush1.msra.mxu0 %v382
    %420 = vmatprep.subr.mxu0 0.0
    %421 = vmatpush1.msra.mxu0 %v381
    %422 = vmatprep.subr.mxu0 0.0
    %423 = vmatpush1.msra.mxu0 %v380
    %424 = vmatprep.subr.mxu0 0.0
    %425 = vmatpush2.msra.mxu0 0.0
    %426 = vmatprep.subr.mxu0 0.0
    %427 = vmatpush2.msra.mxu0 0.0
    %428 = vmatprep.subr.mxu0 0.0
    %429 = vmatpush2.msra.mxu0 0.0
    %430 = vmatprep.subr.mxu0 0.0
    %431 = vmatpush2.msra.mxu0 0.0
    %432 = vmatprep.subr.mxu0 0.0
    %433 = vmatpush2.msra.mxu0 0.0
    %434 = vmatprep.subr.mxu0 0.0
    %435 = vmatpush2.msra.mxu0 0.0
    %436 = vmatprep.subr.mxu0 0.0
    %437 = vmatpush2.msra.mxu0 0.0
    %438 = vmatprep.subr.mxu0 0.0
    %439 = vmatpush2.msra.mxu0 0.0
    %440 = vmatprep.subr.mxu0 0.0
    %441 = vmatpush2.msra.mxu0 0.0
    %442 = vmatprep.subr.mxu0 0.0
    %443 = vmatpush2.msra.mxu0 0.0
    %444 = vmatprep.subr.mxu0 0.0
    %445 = vmatpush2.msra.mxu0 0.0
    %446 = vmatprep.subr.mxu0 0.0
    %447 = vmatpush2.msra.mxu0 0.0
    %448 = vmatprep.subr.mxu0 0.0
    %449 = vmatpush2.msra.mxu0 0.0
    %450 = vmatprep.subr.mxu0 0.0
    %451 = vmatpush2.msra.mxu0 0.0
    %452 = vmatprep.subr.mxu0 0.0
    %453 = vmatpush2.msra.mxu0 0.0
    %454 = vmatprep.subr.mxu0 0.0
    %455 = vmatpush2.msra.mxu0 0.0
    %456 = vmatprep.mubr.f32.mxu0 0.0
    %457 = vmatmul.mubr.f32.gmra.mxu0 %v390
    %v458 = vpop.f32.mrf.mxu0
    %v459 = vadd.f32 %v388, %v458
    %v460 = vpop.f32.mrf.mxu0
    %461 = vdwg.mxu0
    %v462 = vld [vmem:[#allocation5 + $0x108] sm:$0x1]
    %v463 = vld [vmem:[#allocation5 + $0x110] sm:$0x1]
    %v464 = vlaneseq
    %v465 = vshrl.u32 %v464, 7
    %v466 = vsub.s32 0, %v465
    %v467 = vrot.slane %v462, %v466
    %v468 = vmul.f32 %v459, %v467
    %vm469 = vcmask 254976
    %v470 = vsel %vm469, %v468, 0.0
    %471 = vadd.xlane.f32.xlu0 %v470
    %v472 = vpop.xlane.xlu0 %471
    %v473 = vlaneseq
    %v474 = vshrl.u32 %v473, 7
    %v475 = vsub.s32 0, %v474
    %v476 = vrot.slane %v463, %v475
    %v477 = vadd.f32 %v472, %v476
    %v478 = vxor.u32 %v477, 2147483648
    %v479 = vmul.f32 %v478, 1.442695
    %v480 = vpow.pop %v479
    %v481 = vadd.f32 %v480, 1.0
    %v482 = vrcp.pop %v481
    %v483 = vmul.f32 1.0, %v482
    %vm484 = vcmask 1024
    %485 = vst.msk [vmem:[%s3] sm:$0x3] %vm484, %v483
    // Predicated region
    $region18: #{tpu_custom_call.1} parent=1 // pred_check
      _
    $region19: #{tpu_custom_call.1} parent=1 // pred_check_branch
      %487 = sbr.rel (0) target = $region21
    $region20: #{tpu_custom_call.1} parent=1 // pred_region
      %s489 = ssub.s32 16, 16
      %490 = vsyncadd [#allocation4], %s489
      %s492 = sshll.u32 [#allocation7], 4
      %s493 = int_to_ptr.vmem [resolvable:$true] %s492
      %495 = dma.vmem_to_hbm [thread:$0]  %s493, 16, %s2, [#allocation4]
    $region21: #{tpu_custom_call.1} parent=1 // pred_fallthru
      _
    // Predicated region
    $region22: #{tpu_custom_call.1} parent=1 // pred_check
      _
    $region23: #{tpu_custom_call.1} parent=1 // pred_check_branch
      %497 = sbr.rel (0) target = $region25
    $region24: #{tpu_custom_call.1} parent=1 // pred_region
      _
    $region25: #{tpu_custom_call.1} parent=1 // pred_fallthru
      _
    // Predicated region
    $region26: #{tpu_custom_call.1} parent=1 // pred_check
      _
    $region27: #{tpu_custom_call.1} parent=1 // pred_check_branch
      %499 = sbr.rel (0) target = $region29
    $region28: #{tpu_custom_call.1} parent=1 // pred_region
      %500 = dma.done [#allocation4], 16
    $region29: #{tpu_custom_call.1} parent=1 // pred_fallthru
      _
    // Predicated region
    $region30: #{tpu_custom_call.1} parent=1 // pred_check
      _
    $region31: #{tpu_custom_call.1} parent=1 // pred_check_branch
      %502 = sbr.rel (0) target = $region33
    $region32: #{tpu_custom_call.1} parent=1 // pred_region
      _
    $region33: #{tpu_custom_call.1} parent=1 // pred_fallthru
      _
    %503 = vsyncpa [#allocation3], 1
    %504 = vsyncpa [#allocation6], 1
    %505 = vsyncpa [#allocation4], 1

</llo_original>
